<compile_context>
chip_gen: v7x
topology: tpu7x:2x2x1
jax: 0.10.0
libtpu: 0.0.40
codegen_flags: <defaults>
</compile_context>

<pallas_src>
import functools

import jax
import jax.numpy as jnp
from jax import lax
from jax.experimental import pallas as pl
from jax.experimental.pallas import tpu as pltpu


# ----------------------------- kernels ---------------------------------------


def _endpoint_proj_kernel(h_ref, w_ref, b_ref, o_ref):
    # h_ref: (1, TL, D); w_ref: (D, 2*Dh) = [W_end[:, :D].T | W_end[:, D:].T]
    # b_ref: (1, 2*Dh) f32 = [0 | b_end];  o_ref: (1, TL, 2*Dh)
    o_ref[0] = (jnp.dot(h_ref[0], w_ref[...], preferred_element_type=jnp.float32)
                + b_ref[...]).astype(o_ref.dtype)


def _conv_fused_kernel(x_ref, halo_ref, wp_ref, bc_ref, end_ref, o_ref, win_ref,
                       *, max_width, tile_l, halo_rows):
    # x_ref   : (1, TL, D)       current L-tile of h
    # halo_ref: (1, TH, D)       next rows of h (halo, clamped at the end)
    # wp_ref  : (W, D, Dh)       fused tap weights  (conv_w[t] @ p_conv)
    # bc_ref  : (1, Dh)          out_project_conv bias (f32)
    # end_ref : (1, TL, W*Dh)    pre-gathered+projected endpoint half
    # o_ref   : (1, TL, W*2*Dh)  final output tile (lane-dense)
    # win_ref : (TL+HS, D)       VMEM scratch holding the shifted window
    W = max_width
    TL = tile_l
    HS = halo_rows
    D = x_ref.shape[2]
    Dh = wp_ref.shape[2]
    Dt = 2 * Dh

    # Stage the shifted conv window once in VMEM scratch.
    win_ref[pl.ds(0, TL), :] = x_ref[0]
    if W > 1:
        # Only the halo rows can fall past the true sequence end (L % TL == 0),
        # and only on the last L-tile.
        is_last = pl.program_id(1) == pl.num_programs(1) - 1
        TH = halo_ref.shape[1]
        n_copy = min(HS, TH)
        halo = halo_ref[0, pl.ds(0, n_copy), :]
        win_ref[pl.ds(TL, n_copy), :] = jnp.where(
            is_last, jnp.zeros_like(halo), halo)
        if HS > n_copy:  # degenerate short-sequence case: zero-fill remainder
            win_ref[pl.ds(TL + n_copy, HS - n_copy), :] = jnp.zeros(
                (HS - n_copy, D), win_ref.dtype)

    bias = bc_ref[...]                                   # (1, Dh) f32
    acc = jnp.zeros((TL, Dh), jnp.float32)               # projected accumulator
    for t in range(W):
        # width-t conv output, already projected: cumulative sum of fused taps.
        acc = acc + jnp.dot(win_ref[pl.ds(t, TL), :], wp_ref[t],
                            preferred_element_type=jnp.float32)
        # final concat fused into the store: [endpoint half | conv half].
        # NOTE: lane-aligned only when Dh % 128 == 0; small models use masked
        # partial stores (acceptable at these sizes).
        o_ref[0, :, pl.ds(t * Dt, Dh)] = \
            end_ref[0, :, pl.ds(t * Dh, Dh)].astype(o_ref.dtype)
        o_ref[0, :, pl.ds(t * Dt + Dh, Dh)] = (acc + bias).astype(o_ref.dtype)


# ----------------------------- wrapper ----------------------------------------


def _choose_tile(L, HS):
    # Biggest tile that divides L and is a multiple of the halo granule.
    # (v5e/v6e, 128 MiB VMEM, benefit most from 512; fine on v7x at the sizes
    #  the fused weights leave after the 48 MiB cap.)
    for tl in (512, 256, 128):
        if L % tl == 0 and tl % HS == 0:
            return tl
    return L


def conv_share_endpoints(h, span_idx, conv_weight, w_end, b_end,
                         w_conv_proj, b_conv_proj, max_width, *,
                         compute_dtype=jnp.bfloat16):
    """ConvShareEndpoints.forward.

    h: (B, L, D) float; span_idx: (B, L*max_width, 2) int (start, end) indices.
    conv_weight: (D, D, max_width); w_end: (Dh, 2D); b_end: (Dh,)
    w_conv_proj: (Dh, D); b_conv_proj: (Dh,) with Dh = D // 2.
    Returns (B, L, max_width, 2*Dh).
    """
    B, L, D = h.shape
    W = max_width
    Dh = w_conv_proj.shape[0]
    Dt = 2 * Dh
    assert conv_weight.shape == (D, D, W)
    assert w_end.shape == (Dh, 2 * D)
    assert span_idx.shape == (B, L * W, 2)

    out_dtype = h.dtype
    cd = compute_dtype if compute_dtype is not None else h.dtype
    h_c = h.astype(cd)

    # --- weight prep (f32 fusion, then cast to compute dtype) -----------------
    conv_w = jnp.transpose(conv_weight, (2, 1, 0)).astype(jnp.float32)  # (W,Din,Dout)
    p_conv = jnp.transpose(w_conv_proj).astype(jnp.float32)             # (D, Dh)
    # Fold out_project_conv into the tap weights: proj_t = sum_{s<=t} x_s @ wp[s].
    wp = jnp.einsum('tij,jk->tik', conv_w, p_conv,
                    precision=lax.Precision.HIGHEST).astype(cd)         # (W, D, Dh)
    bc = b_conv_proj.reshape(1, Dh).astype(jnp.float32)

    ws = jnp.transpose(w_end[:, :D])                                    # (D, Dh)
    we = jnp.transpose(w_end[:, D:])                                    # (D, Dh)
    wse = jnp.concatenate([ws, we], axis=1).astype(cd)                  # (D, 2*Dh)
    be2 = jnp.concatenate([jnp.zeros((Dh,), jnp.float32),
                           b_end.astype(jnp.float32)]).reshape(1, 2 * Dh)

    # --- tiling ----------------------------------------------------------------
    HS = ((max(W - 1, 1) + 7) // 8) * 8          # halo rows staged in scratch
    TL = _choose_tile(L, HS)
    n_t = L // TL
    TH = HS if TL % HS == 0 else TL              # halo BlockSpec rows

    cparams = pltpu.CompilerParams(
        dimension_semantics=("parallel", "parallel"),
        vmem_limit_bytes=48 * 1024 * 1024)       # <= v7x per-TC VMEM (64 MiB)

    # ---- kernel 1: endpoint projections (project-then-gather) ----------------
    ab = pl.pallas_call(
        _endpoint_proj_kernel,
        out_shape=jax.ShapeDtypeStruct((B, L, 2 * Dh), out_dtype),
        grid_spec=pltpu.PrefetchScalarGridSpec(
            num_scalar_prefetch=0,
            grid=(B, n_t),
            in_specs=[
                pl.BlockSpec((1, TL, D), lambda b, i: (b, i, 0)),
                pl.BlockSpec((D, 2 * Dh), lambda b, i: (0, 0)),
                pl.BlockSpec((1, 2 * Dh), lambda b, i: (0, 0)),
            ],
            out_specs=pl.BlockSpec((1, TL, 2 * Dh), lambda b, i: (b, i, 0))),
        compiler_params=cparams,
    )(h_c, wse, be2)

    # ---- span gather (XLA) -----------------------------------------------------
    # TODO(synk): data-dependent row gather stays in XLA (take_along_axis).
    start = span_idx[..., 0].astype(jnp.int32)                     # (B, L*W)
    end = span_idx[..., 1].astype(jnp.int32)
    a_g = jnp.take_along_axis(ab[..., :Dh], start[:, :, None], axis=1)
    b_g = jnp.take_along_axis(ab[..., Dh:], end[:, :, None], axis=1)
    end_half = (a_g + b_g).reshape(B, L, W * Dh).astype(out_dtype)

    # ---- kernel 2: ConvShare (+ fused projection) + final concat --------------
    kernel = functools.partial(_conv_fused_kernel,
                               max_width=W, tile_l=TL, halo_rows=HS)
    out_flat = pl.pallas_call(
        kernel,
        out_shape=jax.ShapeDtypeStruct((B, L, W * Dt), out_dtype),
        grid_spec=pltpu.PrefetchScalarGridSpec(
            num_scalar_prefetch=0,
            grid=(B, n_t),
            in_specs=[
                pl.BlockSpec((1, TL, D), lambda b, i: (b, i, 0)),
                # minimal halo: TH rows starting at the next tile, clamped.
                pl.BlockSpec(
                    (1, TH, D),
                    lambda b, i: (b, jnp.minimum((i + 1) * (TL // TH),
                                                 L // TH - 1), 0)),
                pl.BlockSpec((W, D, Dh), lambda b, i: (0, 0, 0)),
                pl.BlockSpec((1, Dh), lambda b, i: (0, 0)),
                pl.BlockSpec((1, TL, W * Dh), lambda b, i: (b, i, 0)),
            ],
            out_specs=pl.BlockSpec((1, TL, W * Dt), lambda b, i: (b, i, 0)),
            scratch_shapes=[pltpu.VMEM((TL + HS, D), cd)]),
        compiler_params=cparams,
    )(h_c, h_c, wp, bc, end_half)

    return out_flat.reshape(B, L, W, Dt)


# ------------------------ pure-JAX reference ----------------------------------


def _ref_conv_share_endpoints(h, span_idx, conv_weight, w_end, b_end,
                              w_conv_proj, b_conv_proj, W):
    B, L, D = h.shape
    Dh = w_conv_proj.shape[0]
    hp = lax.Precision.HIGHEST
    # EndpointSpanExtractor(combination='x,y') + out_project_end
    start = span_idx[..., 0]
    end = span_idx[..., 1]
    hs = jnp.take_along_axis(h, start[..., None], axis=1)
    he = jnp.take_along_axis(h, end[..., None], axis=1)
    rep_end = jnp.concatenate([hs, he], axis=-1)                    # (B, S, 2D)
    end_proj = (jnp.einsum('bsd,od->bso', rep_end, w_end, precision=hp)
                + b_end).reshape(B, L, W, Dh)
    # ConvShare
    xt = jnp.swapaxes(h, 1, 2)                                      # (B, D, L)
    reps = []
    for i in range(W):
        xp = jnp.pad(xt, ((0, 0), (0, 0), (0, i)))
        y = lax.conv_general_dilated(xp, conv_weight[:, :, :i + 1], (1,), 'VALID',
                                     dimension_numbers=('NCH', 'OIH', 'NCH'),
                                     precision=hp)
        reps.append(jnp.swapaxes(y, 1, 2))                          # (B, L, D)
    conv_rep = jnp.stack(reps, axis=2)                              # (B, L, W, D)
    conv_proj = jnp.einsum('blwd,od->blwo', conv_rep, w_conv_proj,
                           precision=hp) + b_conv_proj
    return jnp.concatenate([end_proj, conv_proj], axis=-1)


if __name__ == "__main__":
    B, L, D, W = 2, 8, 32, 3
    Dh = D // 2

    key = jax.random.PRNGKey(0)
    k1, k2, k3, k4, k5, k6 = jax.random.split(key, 6)
    h = jax.random.normal(k1, (B, L, D), jnp.float32)
    conv_weight = jax.random.normal(k2, (D, D, W), jnp.float32) / jnp.sqrt(
        jnp.float32(D * W))
    w_end = jax.random.uniform(k3, (Dh, 2 * D), jnp.float32, -1.0, 1.0) / jnp.sqrt(
        jnp.float32(2 * D))
    b_end = jax.random.uniform(k4, (Dh,), jnp.float32, -1.0, 1.0) / jnp.sqrt(
        jnp.float32(2 * D))
    w_conv_proj = jax.random.uniform(k5, (Dh, D), jnp.float32, -1.0, 1.0) / jnp.sqrt(
        jnp.float32(D))
    b_conv_proj = jax.random.uniform(k6, (Dh,), jnp.float32, -1.0, 1.0) / jnp.sqrt(
        jnp.float32(D))

    # span_idx enumerating widths 1..W from each start position (ends clamped)
    ls = jnp.arange(L)[:, None]
    wr = jnp.arange(W)[None, :]
    start = jnp.broadcast_to(ls, (L, W))
    end = jnp.minimum(ls + wr, L - 1)
    span_idx = jnp.stack([start, end], axis=-1).reshape(1, L * W, 2)
    span_idx = jnp.broadcast_to(span_idx, (B, L * W, 2)).astype(jnp.int32)

    ref = _ref_conv_share_endpoints(h, span_idx, conv_weight, w_end, b_end,
                                    w_conv_proj, b_conv_proj, W)

    # f32 MXU path: strict correctness check against the f32 reference.
    out = jax.block_until_ready(
        conv_share_endpoints(h, span_idx, conv_weight, w_end, b_end,
                             w_conv_proj, b_conv_proj, W,
                             compute_dtype=jnp.float32))
    assert out.shape == (B, L, W, 2 * Dh)
    err = float(jnp.max(jnp.abs(out - ref)))
    assert jnp.allclose(out, ref, atol=2e-3, rtol=2e-3), f"mismatch, max err={err}"

    # Default (bf16 MXU inputs, f32 accumulation): sanity / loose check.
    out_bf16 = jax.block_until_ready(
        conv_share_endpoints(h, span_idx, conv_weight, w_end, b_end,
                             w_conv_proj, b_conv_proj, W))
    assert out_bf16.shape == (B, L, W, 2 * Dh)
    assert bool(jnp.isfinite(out_bf16).all())
    err_bf16 = float(jnp.max(jnp.abs(out_bf16 - ref)))
    assert jnp.allclose(out_bf16, ref, atol=1e-1, rtol=1e-1), (
        f"bf16 mismatch, max err={err_bf16}")

    print("KERNEL_OK")
</pallas_src>

<mosaic_0001>
module attributes {stable_mosaic.version = 11 : i64} {
  func.func @_endpoint_proj_kernel(%arg0: i32, %arg1: i32, %arg2: memref<1x8x32xf32, #tpu.memory_space<vmem>>, %arg3: memref<32x32xf32, #tpu.memory_space<vmem>>, %arg4: memref<1x32xf32, #tpu.memory_space<vmem>>, %arg5: memref<1x8x32xf32, #tpu.memory_space<vmem>>) attributes {dimension_semantics = [#tpu.dimension_semantics<parallel>, #tpu.dimension_semantics<parallel>], iteration_bounds = array<i64: 2, 1>, scalar_prefetch = 0 : i64, scratch_operands = 0 : i64, tpu.core_type = #tpu.core_type<tc>, window_params = [{transform_indices = @transform_0, window_bounds = array<i64: 1, 8, 32>}, {pipeline_mode = #tpu.pipeline_mode<synchronous>, transform_indices = @transform_1, window_bounds = array<i64: 32, 32>}, {pipeline_mode = #tpu.pipeline_mode<synchronous>, transform_indices = @transform_2, window_bounds = array<i64: 1, 32>}, {transform_indices = @transform_3, window_bounds = array<i64: 1, 8, 32>}]} {
    %c0 = arith.constant 0 : index
    %c0_0 = arith.constant 0 : index
    %c0_1 = arith.constant 0 : index
    %0 = vector.load %arg2[%c0, %c0_0, %c0_1] : memref<1x8x32xf32, #tpu.memory_space<vmem>>, vector<1x8x32xf32>
    %1 = vector.shape_cast %0 : vector<1x8x32xf32> to vector<8x32xf32>
    %c0_2 = arith.constant 0 : index
    %c0_3 = arith.constant 0 : index
    %2 = vector.load %arg3[%c0_2, %c0_3] : memref<32x32xf32, #tpu.memory_space<vmem>>, vector<32x32xf32>
    %cst = arith.constant dense<0.000000e+00> : vector<8x32xf32>
    %3 = tpu.matmul %1, %2, %cst {dimension_numbers = #tpu.dot_dimension_numbers<[1], [0], [0], [1], [0, 0, 1, 1], [], []>} : vector<8x32xf32>, vector<32x32xf32>, vector<8x32xf32> -> vector<8x32xf32>
    %c0_4 = arith.constant 0 : index
    %c0_5 = arith.constant 0 : index
    %4 = vector.load %arg4[%c0_4, %c0_5] : memref<1x32xf32, #tpu.memory_space<vmem>>, vector<1x32xf32>
    %5 = vector.broadcast %4 : vector<1x32xf32> to vector<8x32xf32>
    %6 = arith.addf %3, %5 : vector<8x32xf32>
    %c0_6 = arith.constant 0 : index
    %c0_7 = arith.constant 0 : index
    %c0_8 = arith.constant 0 : index
    %7 = vector.load %arg5[%c0_6, %c0_7, %c0_8] : memref<1x8x32xf32, #tpu.memory_space<vmem>>, vector<1x8x32xf32>
    %8 = vector.shape_cast %7 : vector<1x8x32xf32> to vector<8x32xf32>
    %9 = vector.shape_cast %6 : vector<8x32xf32> to vector<1x8x32xf32>
    tpu.vector_store %arg5[%c0_6, %c0_7, %c0_8], %9 {strides = array<i32>} : memref<1x8x32xf32, #tpu.memory_space<vmem>>, vector<1x8x32xf32>,
    return
  }
  func.func @transform_0(%arg0: i32, %arg1: i32) -> (i32, i32, i32) {
    %c0_i32 = arith.constant 0 : i32
    %c0_i32_0 = arith.constant 0 : i32
    return %arg0, %arg1, %c0_i32 : i32, i32, i32
  }
  func.func @transform_1(%arg0: i32, %arg1: i32) -> (i32, i32) {
    %c0_i32 = arith.constant 0 : i32
    %c0_i32_0 = arith.constant 0 : i32
    %c0_i32_1 = arith.constant 0 : i32
    return %c0_i32, %c0_i32_0 : i32, i32
  }
  func.func @transform_2(%arg0: i32, %arg1: i32) -> (i32, i32) {
    %c0_i32 = arith.constant 0 : i32
    %c0_i32_0 = arith.constant 0 : i32
    %c0_i32_1 = arith.constant 0 : i32
    return %c0_i32, %c0_i32_0 : i32, i32
  }
  func.func @transform_3(%arg0: i32, %arg1: i32) -> (i32, i32, i32) {
    %c0_i32 = arith.constant 0 : i32
    %c0_i32_0 = arith.constant 0 : i32
    return %arg0, %arg1, %c0_i32 : i32, i32, i32
  }
}

</mosaic_0001>

<llo_original>
// kernel: tpu_custom_call.1
$region0: #{tpu_custom_call.1}
  #allocation0 [shape = 'u32[]', space=smem, size = 0x4, offset = 0x4, fixed_abs, tag = 'smem constant byte address 0x4 - core index']
  #allocation1 [shape = 'u32[144,128]{1,0:T(1,128)}', space=vmem, size = 0x12000, scoped, tag = 'internal scratch']
  %s0 = inlined_call_operand.hbm [shape: f32[2,8,32], index: 0, kind: input, shape index: {}]
  %s1 = inlined_call_operand.hbm [shape: f32[32,32], index: 1, kind: input, shape index: {}]
  %s2 = inlined_call_operand.vmem [shape: f32[1,32], index: 2, kind: input, shape index: {}]
  %s3 = inlined_call_operand.hbm [shape: f32[2,8,32], index: 3, kind: output, shape index: {}]
  %s4 = sld [smem:[#allocation0]]
  $region53: #{tpu_custom_call.1} parent=0
    _
  %s6 = ssub.s32 1, %s4
  %s7 = scalar_select 0, %s6, %s4
  $region1: #{tpu_custom_call.1} parent=0
    #allocation2 [shape = 'u8[8192]{0}', space=vmem, size = 0x2000, scoped, tag = 'input window, operand 0']
    #allocation3 [shape = 's32[2]{0}', space=sflag, size = 0x8, scoped, tag = 'scoped memory for tpu_custom_call.1']
    #allocation4 [shape = 's32[2]{0}', space=sflag, size = 0x8, scoped, tag = 'scoped memory for tpu_custom_call.1']
    #allocation5 [shape = 'u8[16384]{0}', space=vmem, size = 0x4000, scoped, tag = 'input window, operand 1, single buffered']
    #allocation6 [shape = 's32[1]{0}', space=sflag, size = 0x4, scoped, tag = 'scoped memory for tpu_custom_call.1']
    #allocation7 [shape = 'u8[8192]{0}', space=vmem, size = 0x2000, scoped, tag = 'output window, operand 0']
    %8 = vsyncpa [#allocation3], 0
    %s9 = scalar_lea.sflag [#allocation3], 1
    %10 = vsyncpa %s9, 0
    %11 = vsyncpa [#allocation6], 0
    %12 = vsyncpa [#allocation4], 0
    %s13 = scalar_lea.sflag [#allocation4], 1
    %14 = vsyncpa %s13, 0
    loop: start=0, step=1, limit=4
    $region2: #{tpu_custom_call.1} parent=1 // loop_pre_header
      _
    $region3: #{tpu_custom_call.1} parent=1 // loop_header
      %s16 = sphi 0, %s20
      %p17 = scmp.ge.s32.totalorder %s16, 4
      %s23 = sphi 0, %s35
      %s24 = sphi 0, %s31
      %s25 = sphi 0, %s23
      %s26 = sphi 0, %s24
      %s27 = sphi 0, %s25
      %s28 = sphi 0, %s26
      %s40 = sphi 0, %s42
      %s43 = sphi 0, %s40
      %s44 = sphi 0, %s43
      %s60 = sphi 0, %s44
      %s64 = sphi 0, %s64
      %s66 = sphi 0, %s64
      %s67 = sphi 0, %s66
      %s81 = sphi 0, %s67
      %s85 = sphi 0, %s85
      %s87 = sphi 0, %s85
      %s88 = sphi 0, %s87
      %s102 = sphi 0, %s88
      %s110 = sphi 0, %s112
      %s113 = sphi 0, %s110
      %s114 = sphi 0, %s113
      %s130 = sphi 0, %s114
    $region4: #{tpu_custom_call.1} parent=1 // loop_header_branch
      %19 = sbr.rel (%p17) target = $region8
    $region5: #{tpu_custom_call.1} parent=1 // loop_body
      %s21 = ssub.s32 %s16, 1
      %s22 = ssub.s32 %s16, 2
      %s29 = sadd.s32 1, %s24
      %p30 = scmp.ge.s32.totalorder %s29, 1
      %s31 = scalar_select %p30, 0, %s29
      %s32 = sadd.s32 1, %s23
      %s33 = scalar_select %p30, %s32, %s23
      %p34 = scmp.ge.s32.totalorder %s33, 2
      %s35 = scalar_select %p34, 0, %s33
      %s36 = ssub.s32 %s23, %s35
      %s37 = ssub.s32 %s24, %s31
      %s38 = sor.u32 %s36, %s37
      %p39 = scmp.eq.s32.totalorder %s38, 0
      %s41 = sadd.s32 %s40, 1
      %s42 = scalar_select %p39, %s40, %s41
      %p45 = pneg %p39
      %p46 = scmp.eq.s32.totalorder %s16, 1
      %p47 = por %p45, %p46
      %p48 = scmp.ne.s32.totalorder %s40, %s43
      %p49 = scmp.eq.s32.totalorder %s16, 0
      %p50 = por %p48, %p49
      %p51 = scmp.ne.s32.totalorder %s40, %s43
      %p52 = scmp.eq.s32.totalorder %s21, 1
      %p53 = por %p51, %p52
      %p54 = scmp.ne.s32.totalorder %s43, %s44
      %p55 = scmp.eq.s32.totalorder %s21, 0
      %p56 = por %p54, %p55
      %p57 = scmp.ne.s32.totalorder %s43, %s44
      %p58 = scmp.eq.s32.totalorder %s22, 1
      %p59 = por %p57, %p58
      %p61 = scmp.ne.s32.totalorder %s44, %s60
      %p62 = scmp.eq.s32.totalorder %s22, 0
      %p63 = por %p61, %p62
      %s65 = sadd.s32 %s64, 1
      %p68 = scmp.eq.s32.totalorder %s16, 1
      %p69 = scmp.ne.s32.totalorder %s64, %s66
      %p70 = scmp.eq.s32.totalorder %s16, 0
      %p71 = por %p69, %p70
      %p72 = scmp.ne.s32.totalorder %s64, %s66
      %p73 = scmp.eq.s32.totalorder %s21, 1
      %p74 = por %p72, %p73
      %p75 = scmp.ne.s32.totalorder %s66, %s67
      %p76 = scmp.eq.s32.totalorder %s21, 0
      %p77 = por %p75, %p76
      %p78 = scmp.ne.s32.totalorder %s66, %s67
      %p79 = scmp.eq.s32.totalorder %s22, 1
      %p80 = por %p78, %p79
      %p82 = scmp.ne.s32.totalorder %s67, %s81
      %p83 = scmp.eq.s32.totalorder %s22, 0
      %p84 = por %p82, %p83
      %s86 = sadd.s32 %s85, 1
      %p89 = scmp.eq.s32.totalorder %s16, 1
      %p90 = scmp.ne.s32.totalorder %s85, %s87
      %p91 = scmp.eq.s32.totalorder %s16, 0
      %p92 = por %p90, %p91
      %p93 = scmp.ne.s32.totalorder %s85, %s87
      %p94 = scmp.eq.s32.totalorder %s21, 1
      %p95 = por %p93, %p94
      %p96 = scmp.ne.s32.totalorder %s87, %s88
      %p97 = scmp.eq.s32.totalorder %s21, 0
      %p98 = por %p96, %p97
      %p99 = scmp.ne.s32.totalorder %s87, %s88
      %p100 = scmp.eq.s32.totalorder %s22, 1
      %p101 = por %p99, %p100
      %p103 = scmp.ne.s32.totalorder %s88, %s102
      %p104 = scmp.eq.s32.totalorder %s22, 0
      %p105 = por %p103, %p104
      %s106 = ssub.s32 %s23, %s35
      %s107 = ssub.s32 %s24, %s31
      %s108 = sor.u32 %s106, %s107
      %p109 = scmp.eq.s32.totalorder %s108, 0
      %s111 = sadd.s32 %s110, 1
      %s112 = scalar_select %p109, %s110, %s111
      %p115 = pneg %p109
      %p116 = scmp.eq.s32.totalorder %s16, 1
      %p117 = por %p115, %p116
      %p118 = scmp.ne.s32.totalorder %s110, %s113
      %p119 = scmp.eq.s32.totalorder %s16, 0
      %p120 = por %p118, %p119
      %p121 = scmp.ne.s32.totalorder %s110, %s113
      %p122 = scmp.eq.s32.totalorder %s21, 1
      %p123 = por %p121, %p122
      %p124 = scmp.ne.s32.totalorder %s113, %s114
      %p125 = scmp.eq.s32.totalorder %s21, 0
      %p126 = por %p124, %p125
      %p127 = scmp.ne.s32.totalorder %s113, %s114
      %p128 = scmp.eq.s32.totalorder %s22, 1
      %p129 = por %p127, %p128
      %p131 = scmp.ne.s32.totalorder %s114, %s130
      %p132 = scmp.eq.s32.totalorder %s22, 0
      %p133 = por %p131, %p132
      %p134 = scmp.le.s32.totalorder 1, %s16
      %p135 = scmp.lt.s32.totalorder %s16, 3
      %p136 = pnand %p134, %p135
      %p137 = pneg %p136
      // Predicated region
      $region9: #{tpu_custom_call.1} parent=5 // pred_check
        _
      $region10: #{tpu_custom_call.1} parent=5 // pred_check_branch
        %139 = sbr.rel (%p136) target = $region12
      $region11: #{tpu_custom_call.1} parent=5 // pred_region
        %s140 = ssub.s32 %s16, 1
        // Predicated region
        $region13: #{tpu_custom_call.1} parent=11 // pred_check
          %p141 = pneg %p77
        $region14: #{tpu_custom_call.1} parent=11 // pred_check_branch
          %143 = sbr.rel (%p141) target = $region16
        $region15: #{tpu_custom_call.1} parent=11 // pred_region
          %s145 = ssub.s32 512, 512
          %146 = vsyncadd [#allocation6], %s145
          %s147 = sshll.u32 [#allocation5], 4
          %s148 = int_to_ptr.vmem [resolvable:$true] %s147
          %153 = dma.hbm_to_vmem [thread:$0]  %s1, 512, %s148, [#allocation6], 128, 128, 8
        $region16: #{tpu_custom_call.1} parent=11 // pred_fallthru
          _
        // Predicated region
        $region17: #{tpu_custom_call.1} parent=11 // pred_check
          %p154 = pneg %p98
        $region18: #{tpu_custom_call.1} parent=11 // pred_check_branch
          %156 = sbr.rel (%p154) target = $region20
        $region19: #{tpu_custom_call.1} parent=11 // pred_region
          _
        $region20: #{tpu_custom_call.1} parent=11 // pred_fallthru
          _
      $region12: #{tpu_custom_call.1} parent=5 // pred_fallthru
        _
      %p157 = scmp.lt.s32.totalorder %s16, 2
      // Predicated region
      $region21: #{tpu_custom_call.1} parent=5 // pred_check
        %p158 = pneg %p157
      $region22: #{tpu_custom_call.1} parent=5 // pred_check_branch
        %160 = sbr.rel (%p158) target = $region24
      $region23: #{tpu_custom_call.1} parent=5 // pred_region
        // Predicated region
        $region25: #{tpu_custom_call.1} parent=23 // pred_check
          %p161 = pneg %p50
        $region26: #{tpu_custom_call.1} parent=23 // pred_check_branch
          %163 = sbr.rel (%p161) target = $region28
        $region27: #{tpu_custom_call.1} parent=23 // pred_region
          %s164 = sand.u32 %s40, 1
          %s165 = scalar_lea.sflag [#allocation3], %s164
          %s166 = sand.u32 %s40, 1
          %s167 = smul.addr %s166, 8
          %s168 = scalar_lea.vmem [#allocation2], %s167
          %s170 = ssub.s32 128, 128
          %171 = vsyncadd %s165, %s170
          %s172 = sadd.s32 %s24, %s23
          %s173 = smul.addr %s172, 128
          %s174 = scalar_lea.hbm %s0, %s173
          %s176 = sshll.u32 %s168, 4
          %s177 = int_to_ptr.vmem [resolvable:$true] %s176
          %179 = dma.hbm_to_vmem [thread:$0]  %s174, 128, %s177, %s165
        $region28: #{tpu_custom_call.1} parent=23 // pred_fallthru
          _
      $region24: #{tpu_custom_call.1} parent=5 // pred_fallthru
        _
      %p180 = scmp.le.s32.totalorder 1, %s16
      %p181 = scmp.lt.s32.totalorder %s16, 3
      %p182 = pnand %p180, %p181
      %p183 = pneg %p182
      // Predicated region
      $region29: #{tpu_custom_call.1} parent=5 // pred_check
        _
      $region30: #{tpu_custom_call.1} parent=5 // pred_check_branch
        %185 = sbr.rel (%p182) target = $region32
      $region31: #{tpu_custom_call.1} parent=5 // pred_region
        %s186 = ssub.s32 %s16, 1
        %s187 = sand.u32 %s43, 1
        %s188 = scalar_lea.sflag [#allocation3], %s187
        %s189 = sand.u32 %s43, 1
        %s190 = smul.addr %s189, 8
        %s191 = scalar_lea.vmem [#allocation2], %s190
        // Predicated region
        $region33: #{tpu_custom_call.1} parent=31 // pred_check
          %p192 = pneg %p56
        $region34: #{tpu_custom_call.1} parent=31 // pred_check_branch
          %194 = sbr.rel (%p192) target = $region36
        $region35: #{tpu_custom_call.1} parent=31 // pred_region
          %195 = dma.done %s188, 128
        $region36: #{tpu_custom_call.1} parent=31 // pred_fallthru
          _
        // Predicated region
        $region37: #{tpu_custom_call.1} parent=31 // pred_check
          %p196 = pneg %p77
        $region38: #{tpu_custom_call.1} parent=31 // pred_check_branch
          %198 = sbr.rel (%p196) target = $region40
        $region39: #{tpu_custom_call.1} parent=31 // pred_region
          %199 = dma.done [#allocation6], 512
        $region40: #{tpu_custom_call.1} parent=31 // pred_fallthru
          _
        %s200 = sand.u32 %s43, 1
        %s201 = scalar_lea.sflag [#allocation3], %s200
        %s202 = sand.u32 %s43, 1
        %s203 = smul.addr %s202, 8
        %s204 = scalar_lea.vmem [#allocation2], %s203
        %p205 = pneg %p56
        %p206 = pneg %p53
        %p207 = pneg %p77
        %p208 = pneg %p74
        %p209 = pneg %p98
        %p210 = pneg %p95
        %p211 = pneg %p126
        %p212 = pneg %p123
        %s213 = sand.u32 %s113, 1
        %s214 = scalar_lea.sflag [#allocation4], %s213
        %s215 = sand.u32 %s113, 1
        %s216 = smul.addr %s215, 8
        %s217 = scalar_lea.vmem [#allocation7], %s216
        %v218 = vld [vmem:[%s191] sm:$0xff]
        %v219 = vld [vmem:[#allocation5] sm:$0xff]
        %v220 = vld [vmem:[#allocation5 + $0x8] sm:$0xff]
        %v221 = vld [vmem:[#allocation5 + $0x10] sm:$0xff]
        %v222 = vld [vmem:[#allocation5 + $0x18] sm:$0xff]
        %v223 = vld [vmem:[%s2] sm:$0x1]
        %v225 = vlaneseq
        %v226 = vshrl.u32 %v225, 7
        %v227 = vsub.s32 0, %v226
        %v228 = vrot.slane %v223, %v227
        %vm230 = vcmask 261120
        %v232 = vsel %vm230, %v218, 0
        %234 = vmatprep.subr.mxu0 0.0
        %235 = vmatpush1.msra.mxu0 %v219
        %236 = vmatprep.subr.mxu0 0.0
        %237 = vmatpush1.msra.mxu0 %v220
        %238 = vmatprep.subr.mxu0 0.0
        %239 = vmatpush1.msra.mxu0 %v221
        %240 = vmatprep.subr.mxu0 0.0
        %241 = vmatpush1.msra.mxu0 %v222
        %242 = vmatprep.subr.mxu0 0.0
        %243 = vmatpush1.msra.mxu0 0.0
        %244 = vmatprep.subr.mxu0 0.0
        %245 = vmatpush1.msra.mxu0 0.0
        %246 = vmatprep.subr.mxu0 0.0
        %247 = vmatpush1.msra.mxu0 0.0
        %248 = vmatprep.subr.mxu0 0.0
        %249 = vmatpush1.msra.mxu0 0.0
        %250 = vmatprep.subr.mxu0 0.0
        %251 = vmatpush1.msra.mxu0 0.0
        %252 = vmatprep.subr.mxu0 0.0
        %253 = vmatpush1.msra.mxu0 0.0
        %254 = vmatprep.subr.mxu0 0.0
        %255 = vmatpush1.msra.mxu0 0.0
        %256 = vmatprep.subr.mxu0 0.0
        %257 = vmatpush1.msra.mxu0 0.0
        %258 = vmatprep.subr.mxu0 0.0
        %259 = vmatpush1.msra.mxu0 0.0
        %260 = vmatprep.subr.mxu0 0.0
        %261 = vmatpush1.msra.mxu0 0.0
        %262 = vmatprep.subr.mxu0 0.0
        %263 = vmatpush1.msra.mxu0 0.0
        %264 = vmatprep.subr.mxu0 0.0
        %265 = vmatpush1.msra.mxu0 0.0
        %266 = vmatprep.subr.mxu0 0.0
        %267 = vmatpush1.msra.mxu0 0.0
        %268 = vmatprep.subr.mxu0 0.0
        %269 = vmatpush1.msra.mxu0 0.0
        %270 = vmatprep.subr.mxu0 0.0
        %271 = vmatpush1.msra.mxu0 0.0
        %272 = vmatprep.subr.mxu0 0.0
        %273 = vmatpush1.msra.mxu0 0.0
        %274 = vmatprep.subr.mxu0 0.0
        %275 = vmatpush1.msra.mxu0 0.0
        %276 = vmatprep.subr.mxu0 0.0
        %277 = vmatpush1.msra.mxu0 0.0
        %278 = vmatprep.subr.mxu0 0.0
        %279 = vmatpush1.msra.mxu0 0.0
        %280 = vmatprep.subr.mxu0 0.0
        %281 = vmatpush1.msra.mxu0 0.0
        %282 = vmatprep.subr.mxu0 0.0
        %283 = vmatpush1.msra.mxu0 0.0
        %284 = vmatprep.subr.mxu0 0.0
        %285 = vmatpush1.msra.mxu0 0.0
        %286 = vmatprep.subr.mxu0 0.0
        %287 = vmatpush1.msra.mxu0 0.0
        %288 = vmatprep.subr.mxu0 0.0
        %289 = vmatpush1.msra.mxu0 0.0
        %290 = vmatprep.subr.mxu0 0.0
        %291 = vmatpush1.msra.mxu0 0.0
        %292 = vmatprep.subr.mxu0 0.0
        %293 = vmatpush1.msra.mxu0 0.0
        %294 = vmatprep.subr.mxu0 0.0
        %295 = vmatpush1.msra.mxu0 0.0
        %296 = vmatprep.subr.mxu0 0.0
        %297 = vmatpush1.msra.mxu0 0.0
        %298 = vmatprep.mubr.f32.mxu0 0.0
        %299 = vmatmul.mubr.f32.gmra.mrb[0].mxu0 %v232
        %v300 = vpop.f32.mrb[0].mxu0
        %v301 = vadd.f32 %v228, %v300
        %v302 = vpop.f32.mrb[0].mxu0
        %303 = vdwg.mxu0
        %304 = vst.msk [vmem:[%s217] sm:$0xff] %vm230, %v301
        %s305 = sand.u32 %s113, 1
        %s306 = scalar_lea.sflag [#allocation4], %s305
        %s307 = sand.u32 %s113, 1
        %s308 = smul.addr %s307, 8
        %s309 = scalar_lea.vmem [#allocation7], %s308
        // Predicated region
        $region41: #{tpu_custom_call.1} parent=31 // pred_check
          %p310 = pneg %p123
        $region42: #{tpu_custom_call.1} parent=31 // pred_check_branch
          %312 = sbr.rel (%p310) target = $region44
        $region43: #{tpu_custom_call.1} parent=31 // pred_region
          %s314 = ssub.s32 128, 128
          %315 = vsyncadd %s306, %s314
          %s316 = sadd.s32 %s26, %s25
          %s317 = smul.addr %s316, 128
          %s318 = scalar_lea.hbm %s3, %s317
          %s320 = sshll.u32 %s309, 4
          %s321 = int_to_ptr.vmem [resolvable:$true] %s320
          %323 = dma.vmem_to_hbm [thread:$0]  %s321, 128, %s318, %s306
        $region44: #{tpu_custom_call.1} parent=31 // pred_fallthru
          _
      $region32: #{tpu_custom_call.1} parent=5 // pred_fallthru
        _
      %p324 = scmp.le.s32.totalorder 2, %s16
      // Predicated region
      $region45: #{tpu_custom_call.1} parent=5 // pred_check
        %p325 = pneg %p324
      $region46: #{tpu_custom_call.1} parent=5 // pred_check_branch
        %327 = sbr.rel (%p325) target = $region48
      $region47: #{tpu_custom_call.1} parent=5 // pred_region
        %s328 = ssub.s32 %s16, 2
        // Predicated region
        $region49: #{tpu_custom_call.1} parent=47 // pred_check
          %p329 = pneg %p129
        $region50: #{tpu_custom_call.1} parent=47 // pred_check_branch
          %331 = sbr.rel (%p329) target = $region52
        $region51: #{tpu_custom_call.1} parent=47 // pred_region
          %s332 = sand.u32 %s114, 1
          %s333 = scalar_lea.sflag [#allocation4], %s332
          %s334 = sand.u32 %s114, 1
          %s335 = smul.addr %s334, 8
          %s336 = scalar_lea.vmem [#allocation7], %s335
          %337 = dma.done %s333, 128
        $region52: #{tpu_custom_call.1} parent=47 // pred_fallthru
          _
      $region48: #{tpu_custom_call.1} parent=5 // pred_fallthru
        _
    $region6: #{tpu_custom_call.1} parent=1 // loop_footer
      %s20 = sadd.s32 1, %s16
    $region7: #{tpu_custom_call.1} parent=1 // loop_footer_branch
      %15 = sbr.rel target = $region3
    $region8: #{tpu_custom_call.1} parent=1 // loop_exit
      _
    %338 = vsyncpa [#allocation3], 1
    %s339 = scalar_lea.sflag [#allocation3], 1
    %340 = vsyncpa %s339, 1
    %341 = vsyncpa [#allocation6], 1
    %342 = vsyncpa [#allocation4], 1
    %s343 = scalar_lea.sflag [#allocation4], 1
    %344 = vsyncpa %s343, 1

</llo_original>
